<compile_context>
chip_gen: v7x
topology: tpu7x:2x2x1
jax: 0.10.0
libtpu: 0.0.40
codegen_flags: <defaults>
</compile_context>

<pallas_src>
import functools
import math

import jax
import jax.numpy as jnp
from jax.experimental import pallas as pl
from jax.experimental.pallas import tpu as pltpu


def _dice_partial_kernel(x_ref, t_ref, num_ref, den_ref, *,
                         tiles_per_part, valid_cols, use_sigmoid,
                         ignore_index, any_masking, unroll):
    """Accumulate lane-wide partial numerator / denominator sums.

    num_ref / den_ref are (rows, acc_w) f32 accumulators resident in VMEM
    across the reduction grid axis (same output block every step). The final
    (tiny) cross-lane / cross-partition / sublane-group reduction is done by
    the wrapper in plain JAX.
    """
    p = pl.program_id(0)   # parallel partition (TensorCore) index
    k = pl.program_id(1)   # reduction-tile index within this partition

    @pl.when(k == 0)
    def _():
        num_ref[...] = jnp.zeros_like(num_ref)
        den_ref[...] = jnp.zeros_like(den_ref)

    rows, td = x_ref.shape
    _, acc_w = num_ref.shape
    n_chunks = td // acc_w

    g = p * tiles_per_part + k     # global (unclamped) tile index
    col0 = g * td                  # first packed-layout column of this tile

    def accumulate(masked):
        lane_iota = None
        if masked:
            # Hoisted out of the chunk loop (JAX does not CSE broadcasts).
            lane_iota = jax.lax.broadcasted_iota(jnp.int32, (rows, acc_w), 1)

        def body(i, carry):
            num_part, den_part = carry
            c0 = pl.multiple_of(i * acc_w, acc_w)
            x = x_ref[:, pl.ds(c0, acc_w)].astype(jnp.float32)
            t = t_ref[:, pl.ds(c0, acc_w)].astype(jnp.float32)
            if use_sigmoid:
                x = jax.nn.sigmoid(x)
            if ignore_index is not None:
                keep = t != jnp.float32(ignore_index)
                x = jnp.where(keep, x, 0.0)
                t = jnp.where(keep, t, 0.0)
            if masked:
                # Zero the out-of-bounds tail (and phantom tiles) with
                # where-selects (robust to unspecified OOB reads / NaNs).
                in_bounds = (lane_iota + (col0 + i * acc_w)) < valid_cols
                x = jnp.where(in_bounds, x, 0.0)
                t = jnp.where(in_bounds, t, 0.0)
            x_abs = x if use_sigmoid else jnp.abs(x)   # sigmoid(x) >= 0
            return (num_part + x * t, den_part + x_abs + jnp.abs(t))

        init = (jnp.zeros((rows, acc_w), jnp.float32),
                jnp.zeros((rows, acc_w), jnp.float32))
        num_part, den_part = jax.lax.fori_loop(0, n_chunks, body, init,
                                               unroll=unroll)
        num_ref[...] += num_part
        den_ref[...] += den_part

    if not any_masking:
        # Statically known: no tile ever needs masking -> single hot path.
        accumulate(False)
    else:
        needs_mask = (col0 + td) > valid_cols

        @pl.when(jnp.logical_not(needs_mask))
        def _():
            accumulate(False)

        @pl.when(needs_mask)
        def _():
            accumulate(True)


def binary_dice_loss(output, target, *, ignore_index=None, reduction="mean",
                     batch_dice=False, use_sigmoid=True, smooth=1.0,
                     tile_d=32768):
    """JAX/Pallas equivalent of BinaryDiceLoss.forward.

    output, target: arrays of shape [N, *] (e.g. NCHW). target may be any
    dtype (bool/int8/bf16/f32); it streams in its native dtype and is upcast
    per tile inside the kernel.
    """
    assert output.shape[0] == target.shape[0], "output & target batch size don't match"
    assert output.shape == target.shape, "output & target shapes don't match"

    n0 = 1 if batch_dice else output.shape[0]
    total = math.prod(output.shape)
    d = total // n0

    # Sublane packing: fold part of the reduction axis into the row axis
    # (free row-major reshape) whenever the row count would leave vreg
    # sublanes / (8,128) VMEM tiles partially empty.
    pack = 1
    if n0 % 8 != 0:
        for cand in (8, 4, 2):
            if d % cand == 0 and (d // cand) >= 128 and (n0 * cand) % 8 == 0:
                pack = cand
                break
        else:
            for cand in (8, 4, 2):
                if d % cand == 0 and (d // cand) >= 128:
                    pack = cand
                    break
    rows = n0 * pack
    dp = d // pack

    x = jnp.reshape(output, (rows, dp))   # no dtype cast: stream native dtype
    t = jnp.reshape(target, (rows, dp))

    # Reduction tile: multiple of 128, as large as the in-flight VMEM budget
    # allows (2 inputs x 2 pipeline buffers <= 24 MiB, within v7x's 64 MiB
    # parts), so each step moves multi-MiB blocks and the fixed per-step
    # pipeline overhead is amortized.
    if dp < 128:
        td = dp
    else:
        td = min(int(tile_d), (dp // 128) * 128)
        in_flight_budget = 24 * 1024 * 1024
        per_col = 2 * rows * (x.dtype.itemsize + t.dtype.itemsize)
        td = min(td, max(128, (in_flight_budget // per_col) // 128 * 128))
        td = max(128, (td // 128) * 128)
    acc_w = 128 if td % 128 == 0 else td

    num_tiles = pl.cdiv(dp, td)
    # Split the reduction across 2 parallel partitions so both v7x TensorCores
    # stream half of the columns (no-op on single-TC v5e/v6e). Partitions are
    # cdiv-split; phantom tiles are index-clamped and fully masked in-kernel.
    # rows % 8 == 0 is required so the (rows, acc_w) output block respects the
    # (8,128) rule when the output stacks n_parts row-blocks.
    n_parts = 2 if (num_tiles >= 2 and rows % 8 == 0) else 1
    tiles_per_part = pl.cdiv(num_tiles, n_parts)
    has_phantom = n_parts * tiles_per_part > num_tiles
    any_masking = (dp % td != 0) or has_phantom

    last_block = num_tiles - 1
    if has_phantom:
        def col_block(p, k):
            # Clamp phantom tiles onto the last real block (their contribution
            # is zeroed by the in-kernel mask).
            return jnp.minimum(p * tiles_per_part + k, last_block)
    else:
        def col_block(p, k):
            return p * tiles_per_part + k

    n_chunks = td // acc_w
    kernel = functools.partial(
        _dice_partial_kernel,
        tiles_per_part=tiles_per_part,
        valid_cols=dp,
        use_sigmoid=use_sigmoid,
        ignore_index=ignore_index,
        any_masking=any_masking,
        unroll=max(1, min(8, n_chunks)),
    )

    num_parts, den_parts = pl.pallas_call(
        kernel,
        out_shape=(
            jax.ShapeDtypeStruct((n_parts * rows, acc_w), jnp.float32),
            jax.ShapeDtypeStruct((n_parts * rows, acc_w), jnp.float32),
        ),
        grid_spec=pltpu.PrefetchScalarGridSpec(
            num_scalar_prefetch=0,
            grid=(n_parts, tiles_per_part),
            in_specs=[
                pl.BlockSpec((rows, td), lambda p, k: (0, col_block(p, k))),
                pl.BlockSpec((rows, td), lambda p, k: (0, col_block(p, k))),
            ],
            out_specs=[
                pl.BlockSpec((rows, acc_w), lambda p, k: (p, 0)),
                pl.BlockSpec((rows, acc_w), lambda p, k: (p, 0)),
            ],
        ),
        compiler_params=pltpu.CompilerParams(
            dimension_semantics=("parallel", "arbitrary"),
            vmem_limit_bytes=32 * 1024 * 1024,
        ),
    )(x, t)

    # Tiny final reduction in plain JAX: over partitions, packed sublanes, lanes.
    num = jnp.sum(num_parts.reshape(n_parts, n0, pack, acc_w), axis=(0, 2, 3))
    den = jnp.sum(den_parts.reshape(n_parts, n0, pack, acc_w), axis=(0, 2, 3))
    smooth = jnp.float32(smooth)
    loss = 1.0 - (2.0 * num + smooth) / (den + smooth)

    if reduction == "mean":
        return jnp.mean(loss)
    elif reduction == "sum":
        return jnp.sum(loss)
    elif reduction == "none":
        return loss
    else:
        raise Exception("Unexpected reduction {}".format(reduction))


def _reference(output, target, smooth=1.0):
    # Pure-JAX reference matching the PyTorch module with default args.
    x = jax.nn.sigmoid(output.astype(jnp.float32))
    n = output.shape[0]
    x = jnp.reshape(x, (n, -1))
    t = jnp.reshape(target.astype(jnp.float32), (n, -1))
    num = 2.0 * jnp.sum(x * t, axis=1) + smooth
    den = jnp.sum(jnp.abs(x) + jnp.abs(t), axis=1) + smooth
    return jnp.mean(1.0 - num / den)


if __name__ == "__main__":
    key = jax.random.PRNGKey(0)
    k1, k2, k3, k4, k5, k6 = jax.random.split(key, 6)

    # Test 1: small NCHW (spec-consistent shape) -> sublane-packed, single tile.
    N, C, H, W = 2, 4, 16, 16
    logits = jax.random.normal(k1, (N, C, H, W), dtype=jnp.float32)
    target = (jax.random.uniform(k2, (N, C, H, W)) > 0.5).astype(jnp.float32)
    loss = jax.block_until_ready(binary_dice_loss(logits, target))
    ref = jax.block_until_ready(_reference(logits, target))
    assert jnp.allclose(loss, ref, atol=1e-5, rtol=1e-4), (loss, ref)

    # Test 2: odd shapes -> partial last tile exercises the masked tail path.
    N2, C2, H2, W2 = 3, 5, 17, 19
    logits2 = jax.random.normal(k3, (N2, C2, H2, W2), dtype=jnp.float32)
    target2 = (jax.random.uniform(k4, (N2, C2, H2, W2)) > 0.5).astype(jnp.float32)
    loss2 = jax.block_until_ready(binary_dice_loss(logits2, target2))
    ref2 = jax.block_until_ready(_reference(logits2, target2))
    assert jnp.allclose(loss2, ref2, atol=1e-5, rtol=1e-4), (loss2, ref2)

    # Test 3: odd tile count with 2-way partition split (phantom tile path).
    N3, C3, H3, W3 = 8, 7, 10, 10
    logits3 = jax.random.normal(k5, (N3, C3, H3, W3), dtype=jnp.float32)
    target3 = (jax.random.uniform(k6, (N3, C3, H3, W3)) > 0.5).astype(jnp.float32)
    loss3 = jax.block_until_ready(binary_dice_loss(logits3, target3, tile_d=256))
    ref3 = jax.block_until_ready(_reference(logits3, target3))
    assert jnp.allclose(loss3, ref3, atol=1e-5, rtol=1e-4), (loss3, ref3)

    print("KERNEL_OK")
</pallas_src>

<mosaic_0001>
module attributes {stable_mosaic.version = 11 : i64} {
  func.func @_dice_partial_kernel(%arg0: i32, %arg1: i32, %arg2: memref<16x128xf32, #tpu.memory_space<vmem>>, %arg3: memref<16x128xf32, #tpu.memory_space<vmem>>, %arg4: memref<16x128xf32, #tpu.memory_space<vmem>>, %arg5: memref<16x128xf32, #tpu.memory_space<vmem>>) attributes {dimension_semantics = [#tpu.dimension_semantics<parallel>, #tpu.dimension_semantics<arbitrary>], iteration_bounds = array<i64: 1, 1>, scalar_prefetch = 0 : i64, scratch_operands = 0 : i64, tpu.core_type = #tpu.core_type<tc>, window_params = [{transform_indices = @transform_0, window_bounds = array<i64: 16, 128>}, {transform_indices = @transform_1, window_bounds = array<i64: 16, 128>}, {transform_indices = @transform_2, window_bounds = array<i64: 16, 128>}, {transform_indices = @transform_3, window_bounds = array<i64: 16, 128>}]} {
    %c0_i32 = arith.constant 0 : i32
    %0 = arith.cmpi eq, %arg1, %c0_i32 : i32
    %1 = arith.extui %0 : i1 to i32
    %c0_i32_0 = arith.constant 0 : i32
    %2 = arith.cmpi ne, %1, %c0_i32_0 : i32
    scf.if %2 {
      %cst_13 = arith.constant 0.000000e+00 : f32
      %27 = vector.broadcast %cst_13 : f32 to vector<16x128xf32>
      %c0_14 = arith.constant 0 : index
      %c0_15 = arith.constant 0 : index
      %28 = vector.load %arg4[%c0_14, %c0_15] : memref<16x128xf32, #tpu.memory_space<vmem>>, vector<16x128xf32>
      tpu.vector_store %arg4[%c0_14, %c0_15], %27 {strides = array<i32>} : memref<16x128xf32, #tpu.memory_space<vmem>>, vector<16x128xf32>,
      %cst_16 = arith.constant 0.000000e+00 : f32
      %29 = vector.broadcast %cst_16 : f32 to vector<16x128xf32>
      %c0_17 = arith.constant 0 : index
      %c0_18 = arith.constant 0 : index
      %30 = vector.load %arg5[%c0_17, %c0_18] : memref<16x128xf32, #tpu.memory_space<vmem>>, vector<16x128xf32>
      tpu.vector_store %arg5[%c0_17, %c0_18], %29 {strides = array<i32>} : memref<16x128xf32, #tpu.memory_space<vmem>>, vector<16x128xf32>,
    } else {
    }
    %cst = arith.constant 0.000000e+00 : f32
    %3 = vector.broadcast %cst : f32 to vector<16x128xf32>
    %cst_1 = arith.constant 0.000000e+00 : f32
    %4 = vector.broadcast %cst_1 : f32 to vector<16x128xf32>
    %c0_i32_2 = arith.constant 0 : i32
    %c128_i32 = arith.constant 128 : i32
    %5 = arith.muli %c0_i32_2, %c128_i32 : i32
    %6 = tpu.assume_multiple %5, 128 : i32
    %c0 = arith.constant 0 : index
    %7 = arith.index_cast %6 : i32 to index
    %8 = vector.load %arg2[%c0, %7] : memref<16x128xf32, #tpu.memory_space<vmem>>, vector<16x128xf32>
    %c0_3 = arith.constant 0 : index
    %9 = arith.index_cast %6 : i32 to index
    %10 = vector.load %arg3[%c0_3, %9] : memref<16x128xf32, #tpu.memory_space<vmem>>, vector<16x128xf32>
    %11 = arith.negf %8 : vector<16x128xf32>
    %12 = math.exp %11 : vector<16x128xf32>
    %cst_4 = arith.constant 1.000000e+00 : f32
    %13 = vector.broadcast %cst_4 : f32 to vector<16x128xf32>
    %14 = arith.addf %13, %12 : vector<16x128xf32>
    %15 = arith.divf %13, %14 : vector<16x128xf32>
    %16 = arith.mulf %15, %10 : vector<16x128xf32>
    %17 = arith.addf %3, %16 : vector<16x128xf32>
    %18 = arith.addf %4, %15 : vector<16x128xf32>
    %19 = math.absf %10 : vector<16x128xf32>
    %20 = arith.addf %18, %19 : vector<16x128xf32>
    %c1_i32 = arith.constant 1 : i32
    %c0_5 = arith.constant 0 : index
    %c0_6 = arith.constant 0 : index
    %21 = vector.load %arg4[%c0_5, %c0_6] : memref<16x128xf32, #tpu.memory_space<vmem>>, vector<16x128xf32>
    %22 = arith.addf %21, %17 : vector<16x128xf32>
    %c0_7 = arith.constant 0 : index
    %c0_8 = arith.constant 0 : index
    %23 = vector.load %arg4[%c0_7, %c0_8] : memref<16x128xf32, #tpu.memory_space<vmem>>, vector<16x128xf32>
    tpu.vector_store %arg4[%c0_7, %c0_8], %22 {strides = array<i32>} : memref<16x128xf32, #tpu.memory_space<vmem>>, vector<16x128xf32>,
    %c0_9 = arith.constant 0 : index
    %c0_10 = arith.constant 0 : index
    %24 = vector.load %arg5[%c0_9, %c0_10] : memref<16x128xf32, #tpu.memory_space<vmem>>, vector<16x128xf32>
    %25 = arith.addf %24, %20 : vector<16x128xf32>
    %c0_11 = arith.constant 0 : index
    %c0_12 = arith.constant 0 : index
    %26 = vector.load %arg5[%c0_11, %c0_12] : memref<16x128xf32, #tpu.memory_space<vmem>>, vector<16x128xf32>
    tpu.vector_store %arg5[%c0_11, %c0_12], %25 {strides = array<i32>} : memref<16x128xf32, #tpu.memory_space<vmem>>, vector<16x128xf32>,
    return
  }
  func.func @transform_0(%arg0: i32, %arg1: i32) -> (i32, i32) {
    %c1_i32 = arith.constant 1 : i32
    %0 = arith.muli %arg0, %c1_i32 : i32
    %1 = arith.addi %0, %arg1 : i32
    %c0_i32 = arith.constant 0 : i32
    %c0_i32_0 = arith.constant 0 : i32
    return %c0_i32, %1 : i32, i32
  }
  func.func @transform_1(%arg0: i32, %arg1: i32) -> (i32, i32) {
    %c1_i32 = arith.constant 1 : i32
    %0 = arith.muli %arg0, %c1_i32 : i32
    %1 = arith.addi %0, %arg1 : i32
    %c0_i32 = arith.constant 0 : i32
    %c0_i32_0 = arith.constant 0 : i32
    return %c0_i32, %1 : i32, i32
  }
  func.func @transform_2(%arg0: i32, %arg1: i32) -> (i32, i32) {
    %c0_i32 = arith.constant 0 : i32
    %c0_i32_0 = arith.constant 0 : i32
    return %arg0, %c0_i32 : i32, i32
  }
  func.func @transform_3(%arg0: i32, %arg1: i32) -> (i32, i32) {
    %c0_i32 = arith.constant 0 : i32
    %c0_i32_0 = arith.constant 0 : i32
    return %arg0, %c0_i32 : i32, i32
  }
}

</mosaic_0001>

<llo_original>
// kernel: tpu_custom_call.1
$region0: #{tpu_custom_call.1}
  #allocation0 [shape = 'u32[]', space=smem, size = 0x4, offset = 0x4, fixed_abs, tag = 'smem constant byte address 0x4 - core index']
  #allocation1 [shape = 'u32[144,128]{1,0:T(1,128)}', space=vmem, size = 0x12000, scoped, tag = 'internal scratch']
  %s0 = inlined_call_operand.hbm [shape: f32[16,128], index: 0, kind: input, shape index: {}]
  %s1 = inlined_call_operand.hbm [shape: f32[16,128], index: 1, kind: input, shape index: {}]
  %s2 = inlined_call_operand.hbm [shape: f32[16,128], index: 2, kind: output, shape index: {0}]
  %s3 = inlined_call_operand.hbm [shape: f32[16,128], index: 3, kind: output, shape index: {1}]
  %4 = xla_tuple %s2, %s3
  %s5 = sld [smem:[#allocation0]]
  $region38: #{tpu_custom_call.1} parent=0
    _
  %s7 = ssub.s32 1, %s5
  %s8 = scalar_select 0, %s7, %s5
  $region1: #{tpu_custom_call.1} parent=0
    #allocation2 [shape = 'u8[8192]{0}', space=vmem, size = 0x2000, scoped, tag = 'input window, operand 0, single buffered']
    #allocation3 [shape = 's32[1]{0}', space=sflag, size = 0x4, scoped, tag = 'scoped memory for tpu_custom_call.1']
    #allocation4 [shape = 's32[1]{0}', space=sflag, size = 0x4, scoped, tag = 'scoped memory for tpu_custom_call.1']
    #allocation5 [shape = 'u8[8192]{0}', space=vmem, size = 0x2000, scoped, tag = 'input window, operand 1, single buffered']
    #allocation6 [shape = 's32[1]{0}', space=sflag, size = 0x4, scoped, tag = 'scoped memory for tpu_custom_call.1']
    #allocation7 [shape = 'u8[8192]{0}', space=vmem, size = 0x2000, scoped, tag = 'output window, operand 0, single buffered']
    #allocation8 [shape = 'u8[8192]{0}', space=vmem, size = 0x2000, scoped, tag = 'output window, operand 1, single buffered']
    #allocation9 [shape = 's32[1]{0}', space=sflag, size = 0x4, scoped, tag = 'scoped memory for tpu_custom_call.1']
    %9 = vsyncpa [#allocation3], 0
    %10 = vsyncpa [#allocation6], 0
    %11 = vsyncpa [#allocation4], 0
    %12 = vsyncpa [#allocation9], 0
    // Predicated region
    $region2: #{tpu_custom_call.1} parent=1 // pred_check
      _
    $region3: #{tpu_custom_call.1} parent=1 // pred_check_branch
      %14 = sbr.rel (0) target = $region5
    $region4: #{tpu_custom_call.1} parent=1 // pred_region
      %s15 = sadd.s32 0, 0
      %s17 = ssub.s32 256, 256
      %18 = vsyncadd [#allocation3], %s17
      %s19 = smul.addr %s15, 128
      %s20 = scalar_lea.hbm %s0, %s19
      %s21 = sshll.u32 [#allocation2], 4
      %s22 = int_to_ptr.vmem [resolvable:$true] %s21
      %27 = dma.hbm_to_vmem [thread:$0]  %s20, 256, %s22, [#allocation3], 128, 128, 8
    $region5: #{tpu_custom_call.1} parent=1 // pred_fallthru
      _
    // Predicated region
    $region6: #{tpu_custom_call.1} parent=1 // pred_check
      _
    $region7: #{tpu_custom_call.1} parent=1 // pred_check_branch
      %29 = sbr.rel (0) target = $region9
    $region8: #{tpu_custom_call.1} parent=1 // pred_region
      %s30 = sadd.s32 0, 0
      %s32 = ssub.s32 256, 256
      %33 = vsyncadd [#allocation6], %s32
      %s34 = smul.addr %s30, 128
      %s35 = scalar_lea.hbm %s1, %s34
      %s36 = sshll.u32 [#allocation5], 4
      %s37 = int_to_ptr.vmem [resolvable:$true] %s36
      %42 = dma.hbm_to_vmem [thread:$0]  %s35, 256, %s37, [#allocation6], 128, 128, 8
    $region9: #{tpu_custom_call.1} parent=1 // pred_fallthru
      _
    // Predicated region
    $region10: #{tpu_custom_call.1} parent=1 // pred_check
      _
    $region11: #{tpu_custom_call.1} parent=1 // pred_check_branch
      %44 = sbr.rel (0) target = $region13
    $region12: #{tpu_custom_call.1} parent=1 // pred_region
      %45 = dma.done [#allocation3], 256
    $region13: #{tpu_custom_call.1} parent=1 // pred_fallthru
      _
    // Predicated region
    $region14: #{tpu_custom_call.1} parent=1 // pred_check
      _
    $region15: #{tpu_custom_call.1} parent=1 // pred_check_branch
      %47 = sbr.rel (0) target = $region17
    $region16: #{tpu_custom_call.1} parent=1 // pred_region
      %48 = dma.done [#allocation6], 256
    $region17: #{tpu_custom_call.1} parent=1 // pred_fallthru
      _
    %s49 = sadd.s32 0, 0
    %s50 = sadd.s32 0, 0
    %p51 = scmp.eq.s32.totalorder 0, 0
    // Predicated region
    $region18: #{tpu_custom_call.1} parent=1 // pred_check
      %p52 = pneg %p51
    $region19: #{tpu_custom_call.1} parent=1 // pred_check_branch
      %54 = sbr.rel (%p52) target = $region21
    $region20: #{tpu_custom_call.1} parent=1 // pred_region
      %55 = vst [vmem:[#allocation7] sm:$0xff] 0.0
      %56 = vst [vmem:[#allocation7 + $0x8] sm:$0xff] 0.0
      %57 = vst [vmem:[#allocation8] sm:$0xff] 0.0
      %58 = vst [vmem:[#allocation8 + $0x8] sm:$0xff] 0.0
    $region21: #{tpu_custom_call.1} parent=1 // pred_fallthru
      _
    %v59 = vld [vmem:[#allocation2] sm:$0xff]
    %v60 = vld [vmem:[#allocation2 + $0x8] sm:$0xff]
    %v61 = vld [vmem:[#allocation5] sm:$0xff]
    %v62 = vld [vmem:[#allocation5 + $0x8] sm:$0xff]
    %v63 = vxor.u32 %v59, 2147483648
    %v64 = vxor.u32 %v60, 2147483648
    %v65 = vmul.f32 %v63, 1.442695
    %v66 = vpow.pop %v65
    %v67 = vmul.f32 %v64, 1.442695
    %v68 = vpow.pop %v67
    %v69 = vadd.f32 %v66, 1.0
    %v70 = vadd.f32 %v68, 1.0
    %v71 = vrcp.pop %v69
    %v72 = vmul.f32 1.0, %v71
    %v73 = vrcp.pop %v70
    %v74 = vmul.f32 1.0, %v73
    %v75 = vmul.f32 %v72, %v61
    %v76 = vmul.f32 %v74, %v62
    %v77 = vadd.f32 %v75, 0.0
    %v78 = vadd.f32 %v76, 0.0
    %v79 = vadd.f32 %v72, 0.0
    %v80 = vadd.f32 %v74, 0.0
    %v81 = vand.u32 2147483647, %v61
    %v82 = vand.u32 2147483647, %v62
    %v83 = vadd.f32 %v79, %v81
    %v84 = vadd.f32 %v80, %v82
    %v85 = vld [vmem:[#allocation7] sm:$0xff]
    %v86 = vld [vmem:[#allocation7 + $0x8] sm:$0xff]
    %v87 = vadd.f32 %v85, %v77
    %v88 = vadd.f32 %v86, %v78
    %89 = vst [vmem:[#allocation7] sm:$0xff] %v87
    %90 = vst [vmem:[#allocation7 + $0x8] sm:$0xff] %v88
    %v91 = vld [vmem:[#allocation8] sm:$0xff]
    %v92 = vld [vmem:[#allocation8 + $0x8] sm:$0xff]
    %v93 = vadd.f32 %v91, %v83
    %v94 = vadd.f32 %v92, %v84
    %95 = vst [vmem:[#allocation8] sm:$0xff] %v93
    %96 = vst [vmem:[#allocation8 + $0x8] sm:$0xff] %v94
    // Predicated region
    $region22: #{tpu_custom_call.1} parent=1 // pred_check
      _
    $region23: #{tpu_custom_call.1} parent=1 // pred_check_branch
      %98 = sbr.rel (0) target = $region25
    $region24: #{tpu_custom_call.1} parent=1 // pred_region
      %s100 = ssub.s32 256, 256
      %101 = vsyncadd [#allocation4], %s100
      %s102 = sshll.u32 [#allocation7], 4
      %s103 = int_to_ptr.vmem [resolvable:$true] %s102
      %108 = dma.vmem_to_hbm [thread:$0]  %s103, 256, %s2, [#allocation4], 128, 128, 8
    $region25: #{tpu_custom_call.1} parent=1 // pred_fallthru
      _
    // Predicated region
    $region26: #{tpu_custom_call.1} parent=1 // pred_check
      _
    $region27: #{tpu_custom_call.1} parent=1 // pred_check_branch
      %110 = sbr.rel (0) target = $region29
    $region28: #{tpu_custom_call.1} parent=1 // pred_region
      %s112 = ssub.s32 256, 256
      %113 = vsyncadd [#allocation9], %s112
      %s114 = sshll.u32 [#allocation8], 4
      %s115 = int_to_ptr.vmem [resolvable:$true] %s114
      %120 = dma.vmem_to_hbm [thread:$0]  %s115, 256, %s3, [#allocation9], 128, 128, 8
    $region29: #{tpu_custom_call.1} parent=1 // pred_fallthru
      _
    // Predicated region
    $region30: #{tpu_custom_call.1} parent=1 // pred_check
      _
    $region31: #{tpu_custom_call.1} parent=1 // pred_check_branch
      %122 = sbr.rel (0) target = $region33
    $region32: #{tpu_custom_call.1} parent=1 // pred_region
      %123 = dma.done [#allocation4], 256
    $region33: #{tpu_custom_call.1} parent=1 // pred_fallthru
      _
    // Predicated region
    $region34: #{tpu_custom_call.1} parent=1 // pred_check
      _
    $region35: #{tpu_custom_call.1} parent=1 // pred_check_branch
      %125 = sbr.rel (0) target = $region37
    $region36: #{tpu_custom_call.1} parent=1 // pred_region
      %126 = dma.done [#allocation9], 256
    $region37: #{tpu_custom_call.1} parent=1 // pred_fallthru
      _
    %127 = vsyncpa [#allocation3], 1
    %128 = vsyncpa [#allocation6], 1
    %129 = vsyncpa [#allocation4], 1
    %130 = vsyncpa [#allocation9], 1

</llo_original>
